<compile_context>
chip_gen: v7x
topology: tpu7x:2x2x1
jax: 0.10.0
libtpu: 0.0.40
codegen_flags: <defaults>
</compile_context>

<pallas_src>
import jax
import jax.numpy as jnp
from jax.experimental import pallas as pl
from jax.experimental.pallas import tpu as pltpu

EPS = 1e-5
LANE = 128
VMEM_LIMIT = 32 * 1024 * 1024      # explicit scoped-VMEM limit (> v5e's 16 MiB default)
TILE_BUDGET = 12 * 1024 * 1024     # per-call working-set target (safe on v7x 64 MiB)


# ---------------------------------------------------------------------------
# small helpers
# ---------------------------------------------------------------------------
def _round_up(a, b):
    return (a + b - 1) // b * b


def _pad_rows(a, rows):
    return a if a.shape[0] == rows else jnp.pad(a, ((0, rows - a.shape[0]), (0, 0)))


def _pad_cols(a, cols):
    if a.shape[-1] == cols:
        return a
    pad = [(0, 0)] * (a.ndim - 1) + [(0, cols - a.shape[-1])]
    return jnp.pad(a, pad)


def _compiler_params(semantics):
    return pltpu.CompilerParams(dimension_semantics=semantics,
                                vmem_limit_bytes=VMEM_LIMIT)


def _pick_tm(k, cpad, m):
    # double-buffered bf16 lhs tile + double-buffered f32 out tile + resident bf16 weight
    per_row = 2 * k * 2 + 2 * cpad * 4
    tm = max(32, (TILE_BUDGET - k * cpad * 2) // per_row)
    tm = min(tm, 2048, _round_up(m, 32))
    return int(max(32, tm // 32 * 32))


# ---------------------------------------------------------------------------
# Pass A kernels: conv matmul + per-channel sum / sum-of-squares accumulation
# (BN batch statistics as a cross-tile reduction over the "arbitrary" grid axis)
# ---------------------------------------------------------------------------
def _matmul_stats_kernel(p_ref, w_ref, o_ref, sum_ref, ssq_ref):
    acc = jnp.dot(p_ref[...], w_ref[...], preferred_element_type=jnp.float32)
    o_ref[...] = acc

    @pl.when(pl.program_id(0) == 0)
    def _init():
        sum_ref[...] = jnp.zeros_like(sum_ref)
        ssq_ref[...] = jnp.zeros_like(ssq_ref)

    sum_ref[...] += jnp.sum(acc, axis=0, keepdims=True)
    ssq_ref[...] += jnp.sum(acc * acc, axis=0, keepdims=True)


def _make_conv3x3_s1_kernel(hc, wc):
    # per-image 3x3 / stride-1 / pad-1 conv: kw is unrolled in the patch slab,
    # the three kh shifts are sublane-aligned row slices of the VMEM block.
    def kernel(p_ref, w_ref, o_ref, sum_ref, ssq_ref):
        acc = jnp.dot(p_ref[0, 0:hc * wc, :], w_ref[0],
                      preferred_element_type=jnp.float32)
        for kh in (1, 2):
            acc = acc + jnp.dot(p_ref[0, kh * wc:kh * wc + hc * wc, :], w_ref[kh],
                                preferred_element_type=jnp.float32)
        o_ref[0] = acc

        @pl.when(pl.program_id(0) == 0)
        def _init():
            sum_ref[...] = jnp.zeros_like(sum_ref)
            ssq_ref[...] = jnp.zeros_like(ssq_ref)

        sum_ref[...] += jnp.sum(acc, axis=0, keepdims=True)
        ssq_ref[...] += jnp.sum(acc * acc, axis=0, keepdims=True)
    return kernel


# ---------------------------------------------------------------------------
# Pass B kernels: folded BatchNorm (scale/shift) + ReLU (+ residual add)
# ---------------------------------------------------------------------------
def _scale_shift_relu_kernel(c_ref, sc_ref, sh_ref, o_ref):
    y = c_ref[...] * sc_ref[...] + sh_ref[...]
    o_ref[...] = jnp.maximum(y, 0.0).astype(o_ref.dtype)


def _scale_shift_add_relu_kernel(c_ref, r_ref, sc_ref, sh_ref, rsc_ref, rsh_ref, o_ref):
    left = c_ref[...] * sc_ref[...] + sh_ref[...]
    right = r_ref[...] * rsc_ref[...] + rsh_ref[...]
    o_ref[...] = jnp.maximum(left + right, 0.0).astype(o_ref.dtype)


# ---------------------------------------------------------------------------
# pallas_call wrappers
# ---------------------------------------------------------------------------
def _conv_matmul_bn_stats(patches, weight):
    """patches: (M, K) bf16, weight: (K, Cpad) bf16 ->
       conv (M, Cpad) f32, per-channel sum / sum-of-squares (1, Cpad) f32."""
    m, k = patches.shape
    cpad = weight.shape[1]
    tm = _pick_tm(k, cpad, m)
    mpad = _round_up(m, tm)
    patches = _pad_rows(patches, mpad)          # zero rows contribute 0 to BN sums
    conv, s, ss = pl.pallas_call(
        _matmul_stats_kernel,
        out_shape=(jax.ShapeDtypeStruct((mpad, cpad), jnp.float32),
                   jax.ShapeDtypeStruct((1, cpad), jnp.float32),
                   jax.ShapeDtypeStruct((1, cpad), jnp.float32)),
        grid=(mpad // tm,),
        in_specs=[pl.BlockSpec((tm, k), lambda i: (i, 0)),
                  pl.BlockSpec((k, cpad), lambda i: (0, 0))],        # resident weight
        out_specs=(pl.BlockSpec((tm, cpad), lambda i: (i, 0)),
                   pl.BlockSpec((1, cpad), lambda i: (0, 0)),        # resident accumulators
                   pl.BlockSpec((1, cpad), lambda i: (0, 0))),
        compiler_params=_compiler_params(("arbitrary",)),            # BN stats reduce over M tiles
        cost_estimate=pl.CostEstimate(
            flops=int(2 * mpad * k * cpad), transcendentals=0,
            bytes_accessed=int(mpad * k * 2 + k * cpad * 2 + mpad * cpad * 4)),
    )(patches, weight)
    return conv[:m], s, ss


def _conv3x3_s1_bn_stats(pw, wk, hc, wc):
    """pw: (N, (hc+2)*wc, 3*Cin) bf16 width-unrolled patches; wk: (3, 3*Cin, Cpad) bf16."""
    n, rows, kc3 = pw.shape
    cpad = wk.shape[-1]
    conv, s, ss = pl.pallas_call(
        _make_conv3x3_s1_kernel(hc, wc),
        out_shape=(jax.ShapeDtypeStruct((n, hc * wc, cpad), jnp.float32),
                   jax.ShapeDtypeStruct((1, cpad), jnp.float32),
                   jax.ShapeDtypeStruct((1, cpad), jnp.float32)),
        grid=(n,),
        in_specs=[pl.BlockSpec((1, rows, kc3), lambda i: (i, 0, 0)),
                  pl.BlockSpec((3, kc3, cpad), lambda i: (0, 0, 0))],  # resident weight
        out_specs=(pl.BlockSpec((1, hc * wc, cpad), lambda i: (i, 0, 0)),
                   pl.BlockSpec((1, cpad), lambda i: (0, 0)),
                   pl.BlockSpec((1, cpad), lambda i: (0, 0))),
        compiler_params=_compiler_params(("arbitrary",)),
        cost_estimate=pl.CostEstimate(
            flops=int(2 * n * hc * wc * 3 * kc3 * cpad), transcendentals=0,
            bytes_accessed=int(pw.size * 2 + wk.size * 2 + n * hc * wc * cpad * 4)),
    )(pw, wk)
    return conv.reshape(n * hc * wc, cpad), s, ss


def _bn_scale_shift(s, ss, count, gamma, beta, cpad):
    mean = s / count
    var = jnp.maximum(ss / count - mean * mean, 0.0)
    scale = _pad_cols(gamma.astype(jnp.float32), cpad) * jax.lax.rsqrt(var + EPS)
    shift = _pad_cols(beta.astype(jnp.float32), cpad) - mean * scale
    return scale, shift


def _bn_act(conv, scale, shift, resid=None, rscale=None, rshift=None,
            out_dtype=jnp.float32):
    m, cpad = conv.shape
    tm = min(1024, _round_up(m, 32))
    mpad = _round_up(m, tm)
    row_spec = pl.BlockSpec((tm, cpad), lambda i: (i, 0))
    ch_spec = pl.BlockSpec((1, cpad), lambda i: (0, 0))
    if resid is None:
        kernel = _scale_shift_relu_kernel
        args = (_pad_rows(conv, mpad), scale, shift)
        in_specs = [row_spec, ch_spec, ch_spec]
    else:
        kernel = _scale_shift_add_relu_kernel
        args = (_pad_rows(conv, mpad), _pad_rows(resid, mpad),
                scale, shift, rscale, rshift)
        in_specs = [row_spec, row_spec, ch_spec, ch_spec, ch_spec, ch_spec]
    out = pl.pallas_call(
        kernel,
        out_shape=jax.ShapeDtypeStruct((mpad, cpad), out_dtype),
        grid=(mpad // tm,),
        in_specs=in_specs,
        out_specs=row_spec,
        compiler_params=_compiler_params(("parallel",)),   # megacore-shardable on v7x
    )(*args)
    return out[:m]


# ---------------------------------------------------------------------------
# Patch / weight layout glue (plain JAX)
# ---------------------------------------------------------------------------
def _im2col(x_nhwc, ksize, stride, pad):
    n, h, w, c = x_nhwc.shape
    xp = jnp.pad(x_nhwc, ((0, 0), (pad, pad), (pad, pad), (0, 0)))
    oh = (h + 2 * pad - ksize) // stride + 1
    ow = (w + 2 * pad - ksize) // stride + 1
    cols = []
    for kh in range(ksize):
        for kw in range(ksize):
            cols.append(xp[:, kh:kh + (oh - 1) * stride + 1:stride,
                           kw:kw + (ow - 1) * stride + 1:stride, :])
    patches = jnp.stack(cols, axis=3)                     # (n, oh, ow, k*k, c)
    return patches.reshape(n * oh * ow, ksize * ksize * c), oh, ow


def _width_patches(y_nhwc):
    # 3-wide width-unrolled patches for a stride-1 / pad-1 3x3 conv; the kh
    # shifts are taken in-kernel -> 3x HBM footprint instead of im2col's 9x.
    n, h, w, c = y_nhwc.shape
    yp = jnp.pad(y_nhwc, ((0, 0), (1, 1), (1, 1), (0, 0)))
    cols = [yp[:, :, kw:kw + w, :] for kw in range(3)]    # each (n, h+2, w, c)
    pw = jnp.stack(cols, axis=3)                          # (n, h+2, w, 3, c)
    return pw.reshape(n, (h + 2) * w, 3 * c)


def _pack_w3x3(w_hwio, cpad):
    kh, kw, cin, cout = w_hwio.shape
    wk = w_hwio.reshape(kh, kw * cin, cout)               # (3, 3*cin, cout) kw-major
    return _pad_cols(wk, cpad).astype(jnp.bfloat16)


# ---------------------------------------------------------------------------
# ResidualBlock forward
# ---------------------------------------------------------------------------
def residual_block_forward(x_nchw, params, stride):
    x = jnp.transpose(x_nchw, (0, 2, 3, 1)).astype(jnp.float32)   # -> NHWC
    n, h, w, cin = x.shape
    cout = params["w1"].shape[-1]
    cpad = _round_up(cout, LANE)                                  # lane-dense channels
    oh = (h + 2 - 3) // stride + 1
    ow = (w + 2 - 3) // stride + 1
    m = n * oh * ow

    # ---- conv1 (3x3, stride, pad 1) + BN stats -----------------------------
    if stride == 1:
        pw1 = _width_patches(x).astype(jnp.bfloat16)
        conv1, s1, ss1 = _conv3x3_s1_bn_stats(pw1, _pack_w3x3(params["w1"], cpad), oh, ow)
    else:
        # TODO(synk): strided 3x3 still uses a JAX-side im2col (9/stride^2 HBM
        # blowup); an in-kernel halo-DMA formulation would remove it entirely.
        p1, _, _ = _im2col(x, 3, stride, 1)
        w1 = _pad_cols(params["w1"].reshape(-1, cout), cpad).astype(jnp.bfloat16)
        conv1, s1, ss1 = _conv_matmul_bn_stats(p1.astype(jnp.bfloat16), w1)
    sc1, sh1 = _bn_scale_shift(s1, ss1, m, params["g1"], params["b1"], cpad)

    # ---- BN1 + ReLU (folded scale/shift); bf16 output feeds conv2's MXU ----
    left1 = _bn_act(conv1, sc1, sh1, out_dtype=jnp.bfloat16)      # (m, cpad)

    # ---- conv2 (3x3, stride 1, pad 1) + BN stats: in-kernel kh shifts ------
    # TODO(synk): left1 still round-trips through HBM between the two convs; a
    # fully fused conv1->conv2 kernel (left1 kept in VMEM with halo rows) would
    # also remove that write + 3x read.
    y1 = left1.reshape(n, oh, ow, cpad)[..., :cout]
    conv2, s2, ss2 = _conv3x3_s1_bn_stats(_width_patches(y1),
                                          _pack_w3x3(params["w2"], cpad), oh, ow)
    sc2, sh2 = _bn_scale_shift(s2, ss2, m, params["g2"], params["b2"], cpad)

    # ---- shortcut ----------------------------------------------------------
    if stride != 1 or cin != cout:
        pr = x[:, ::stride, ::stride, :].reshape(m, cin)          # 1x1 conv: no blowup
        wr = _pad_cols(params["wr"].reshape(cin, cout), cpad).astype(jnp.bfloat16)
        resid, sr, ssr = _conv_matmul_bn_stats(pr.astype(jnp.bfloat16), wr)
        rsc, rsh = _bn_scale_shift(sr, ssr, m, params["gr"], params["br"], cpad)
    else:
        resid = _pad_cols(x.reshape(m, cin), cpad)                # identity (f32)
        rsc = jnp.ones((1, cpad), jnp.float32)
        rsh = jnp.zeros((1, cpad), jnp.float32)

    # ---- BN2 + shortcut-BN + residual add + ReLU (single fused pass) -------
    out = _bn_act(conv2, sc2, sh2, resid=resid, rscale=rsc, rshift=rsh,
                  out_dtype=jnp.float32)
    out = out[:, :cout].reshape(n, oh, ow, cout)
    return jnp.transpose(out, (0, 3, 1, 2))                       # back to NCHW


# ---------------------------------------------------------------------------
# Deterministic parameter init (weights stored in HWIO layout)
# ---------------------------------------------------------------------------
def init_params(key, cin, cout, stride):
    ks = jax.random.split(key, 8)
    p = {
        "w1": jax.random.normal(ks[0], (3, 3, cin, cout), jnp.float32) * 0.1,
        "g1": 1.0 + 0.1 * jax.random.normal(ks[1], (1, cout), jnp.float32),
        "b1": 0.1 * jax.random.normal(ks[2], (1, cout), jnp.float32),
        "w2": jax.random.normal(ks[3], (3, 3, cout, cout), jnp.float32) * 0.1,
        "g2": 1.0 + 0.1 * jax.random.normal(ks[4], (1, cout), jnp.float32),
        "b2": 0.1 * jax.random.normal(ks[5], (1, cout), jnp.float32),
    }
    if stride != 1 or cin != cout:
        p["wr"] = jax.random.normal(ks[6], (1, 1, cin, cout), jnp.float32) * 0.1
        p["gr"] = 1.0 + 0.1 * jax.random.normal(ks[7], (1, cout), jnp.float32),
        p["gr"] = p["gr"][0]
        p["br"] = jnp.zeros((1, cout), jnp.float32)
    return p


# ---------------------------------------------------------------------------
# Pure-JAX reference (for correctness checks)
# ---------------------------------------------------------------------------
def ref_forward(x_nchw, params, stride, bf16_conv_inputs=False):
    x = jnp.transpose(x_nchw, (0, 2, 3, 1)).astype(jnp.float32)

    def rnd(a):
        if bf16_conv_inputs:
            return a.astype(jnp.bfloat16).astype(jnp.float32)
        return a

    def conv(y, wgt, s, pad):
        return jax.lax.conv_general_dilated(
            rnd(y), rnd(wgt), (s, s), ((pad, pad), (pad, pad)),
            dimension_numbers=("NHWC", "HWIO", "NHWC"),
            precision=jax.lax.Precision.HIGHEST)

    def bn(y, g, b):
        mean = jnp.mean(y, axis=(0, 1, 2), keepdims=True)
        var = jnp.mean(jnp.square(y - mean), axis=(0, 1, 2), keepdims=True)
        return ((y - mean) * jax.lax.rsqrt(var + EPS)
                * g.reshape(1, 1, 1, -1) + b.reshape(1, 1, 1, -1))

    cin = x.shape[-1]
    cout = params["w1"].shape[-1]
    left = jax.nn.relu(bn(conv(x, params["w1"], stride, 1), params["g1"], params["b1"]))
    left = bn(conv(left, params["w2"], 1, 1), params["g2"], params["b2"])
    if stride != 1 or cin != cout:
        right = bn(conv(x, params["wr"], stride, 0), params["gr"], params["br"])
    else:
        right = x
    return jnp.transpose(jax.nn.relu(left + right), (0, 3, 1, 2))


if __name__ == "__main__":
    key = jax.random.PRNGKey(0)
    configs = [
        (4, 8, 2),   # projection shortcut + strided conv1 (im2col matmul path)
        (8, 8, 1),   # identity shortcut + stride-1 conv1 (in-kernel kh-shift path)
    ]
    batch, hw = 2, 16
    for idx, (cin, cout, stride) in enumerate(configs):
        kx, kp = jax.random.split(jax.random.fold_in(key, idx))
        x = jax.random.normal(kx, (batch, cin, hw, hw), jnp.float32)
        params = init_params(kp, cin, cout, stride)

        out = jax.block_until_ready(residual_block_forward(x, params, stride))
        ref_same = ref_forward(x, params, stride, bf16_conv_inputs=True)
        ref_f32 = ref_forward(x, params, stride, bf16_conv_inputs=False)

        assert out.shape == (batch, cout, hw // stride, hw // stride), out.shape
        assert bool(jnp.all(jnp.isfinite(out)))
        # tight: kernel vs. a reference computing the same math
        # (bf16 conv operands, f32 accumulation, batch-stat BN)
        assert bool(jnp.allclose(out, ref_same, rtol=5e-3, atol=5e-3)), \
            float(jnp.max(jnp.abs(out - ref_same)))
        # loose sanity: kernel vs. the full-f32 reference (bf16 MXU operands)
        assert bool(jnp.allclose(out, ref_f32, rtol=5e-2, atol=5e-2)), \
            float(jnp.max(jnp.abs(out - ref_f32)))
    print("KERNEL_OK")
</pallas_src>

<mosaic_0001>
module attributes {stable_mosaic.version = 11 : i64} {
  func.func @_matmul_stats_kernel(%arg0: i32, %arg1: memref<128x36xbf16, #tpu.memory_space<vmem>>, %arg2: memref<36x128xbf16, #tpu.memory_space<vmem>>, %arg3: memref<128x128xf32, #tpu.memory_space<vmem>>, %arg4: memref<1x128xf32, #tpu.memory_space<vmem>>, %arg5: memref<1x128xf32, #tpu.memory_space<vmem>>) attributes {dimension_semantics = [#tpu.dimension_semantics<arbitrary>], iteration_bounds = array<i64: 1>, scalar_prefetch = 0 : i64, scratch_operands = 0 : i64, tpu.core_type = #tpu.core_type<tc>, window_params = [{transform_indices = @transform_0, window_bounds = array<i64: 128, 36>}, {pipeline_mode = #tpu.pipeline_mode<synchronous>, transform_indices = @transform_1, window_bounds = array<i64: 36, 128>}, {transform_indices = @transform_2, window_bounds = array<i64: 128, 128>}, {pipeline_mode = #tpu.pipeline_mode<synchronous>, transform_indices = @transform_3, window_bounds = array<i64: 1, 128>}, {pipeline_mode = #tpu.pipeline_mode<synchronous>, transform_indices = @transform_4, window_bounds = array<i64: 1, 128>}]} {
    %c0 = arith.constant 0 : index
    %c0_0 = arith.constant 0 : index
    %0 = vector.load %arg1[%c0, %c0_0] : memref<128x36xbf16, #tpu.memory_space<vmem>>, vector<128x36xbf16>
    %c0_1 = arith.constant 0 : index
    %c0_2 = arith.constant 0 : index
    %1 = vector.load %arg2[%c0_1, %c0_2] : memref<36x128xbf16, #tpu.memory_space<vmem>>, vector<36x128xbf16>
    %cst = arith.constant dense<0.000000e+00> : vector<128x128xf32>
    %2 = tpu.matmul %0, %1, %cst {dimension_numbers = #tpu.dot_dimension_numbers<[1], [0], [0], [1], [0, 0, 1, 1], [], []>} : vector<128x36xbf16>, vector<36x128xbf16>, vector<128x128xf32> -> vector<128x128xf32>
    %c0_3 = arith.constant 0 : index
    %c0_4 = arith.constant 0 : index
    %3 = vector.load %arg3[%c0_3, %c0_4] : memref<128x128xf32, #tpu.memory_space<vmem>>, vector<128x128xf32>
    tpu.vector_store %arg3[%c0_3, %c0_4], %2 {strides = array<i32>} : memref<128x128xf32, #tpu.memory_space<vmem>>, vector<128x128xf32>,
    %c0_i32 = arith.constant 0 : i32
    %4 = arith.cmpi eq, %arg0, %c0_i32 : i32
    %5 = arith.extui %4 : i1 to i32
    %c0_i32_5 = arith.constant 0 : i32
    %6 = arith.cmpi ne, %5, %c0_i32_5 : i32
    scf.if %6 {
      %cst_16 = arith.constant 0.000000e+00 : f32
      %18 = vector.broadcast %cst_16 : f32 to vector<1x128xf32>
      %c0_17 = arith.constant 0 : index
      %c0_18 = arith.constant 0 : index
      %19 = vector.load %arg4[%c0_17, %c0_18] : memref<1x128xf32, #tpu.memory_space<vmem>>, vector<1x128xf32>
      tpu.vector_store %arg4[%c0_17, %c0_18], %18 {strides = array<i32>} : memref<1x128xf32, #tpu.memory_space<vmem>>, vector<1x128xf32>,
      %cst_19 = arith.constant 0.000000e+00 : f32
      %20 = vector.broadcast %cst_19 : f32 to vector<1x128xf32>
      %c0_20 = arith.constant 0 : index
      %c0_21 = arith.constant 0 : index
      %21 = vector.load %arg5[%c0_20, %c0_21] : memref<1x128xf32, #tpu.memory_space<vmem>>, vector<1x128xf32>
      tpu.vector_store %arg5[%c0_20, %c0_21], %20 {strides = array<i32>} : memref<1x128xf32, #tpu.memory_space<vmem>>, vector<1x128xf32>,
    } else {
    }
    %c0_6 = arith.constant 0 : index
    %c0_7 = arith.constant 0 : index
    %7 = vector.load %arg4[%c0_6, %c0_7] : memref<1x128xf32, #tpu.memory_space<vmem>>, vector<1x128xf32>
    %cst_8 = arith.constant dense<0.000000e+00> : vector<128xf32>
    %8 = vector.multi_reduction <add>, %2, %cst_8 [0] : vector<128x128xf32> to vector<128xf32>
    %9 = vector.shape_cast %8 : vector<128xf32> to vector<1x128xf32>
    %10 = arith.addf %7, %9 : vector<1x128xf32>
    %c0_9 = arith.constant 0 : index
    %c0_10 = arith.constant 0 : index
    %11 = vector.load %arg4[%c0_9, %c0_10] : memref<1x128xf32, #tpu.memory_space<vmem>>, vector<1x128xf32>
    tpu.vector_store %arg4[%c0_9, %c0_10], %10 {strides = array<i32>} : memref<1x128xf32, #tpu.memory_space<vmem>>, vector<1x128xf32>,
    %c0_11 = arith.constant 0 : index
    %c0_12 = arith.constant 0 : index
    %12 = vector.load %arg5[%c0_11, %c0_12] : memref<1x128xf32, #tpu.memory_space<vmem>>, vector<1x128xf32>
    %13 = arith.mulf %2, %2 : vector<128x128xf32>
    %cst_13 = arith.constant dense<0.000000e+00> : vector<128xf32>
    %14 = vector.multi_reduction <add>, %13, %cst_13 [0] : vector<128x128xf32> to vector<128xf32>
    %15 = vector.shape_cast %14 : vector<128xf32> to vector<1x128xf32>
    %16 = arith.addf %12, %15 : vector<1x128xf32>
    %c0_14 = arith.constant 0 : index
    %c0_15 = arith.constant 0 : index
    %17 = vector.load %arg5[%c0_14, %c0_15] : memref<1x128xf32, #tpu.memory_space<vmem>>, vector<1x128xf32>
    tpu.vector_store %arg5[%c0_14, %c0_15], %16 {strides = array<i32>} : memref<1x128xf32, #tpu.memory_space<vmem>>, vector<1x128xf32>,
    return
  }
  func.func @transform_0(%arg0: i32) -> (i32, i32) {
    %c0_i32 = arith.constant 0 : i32
    %c0_i32_0 = arith.constant 0 : i32
    return %arg0, %c0_i32 : i32, i32
  }
  func.func @transform_1(%arg0: i32) -> (i32, i32) {
    %c0_i32 = arith.constant 0 : i32
    %c0_i32_0 = arith.constant 0 : i32
    %c0_i32_1 = arith.constant 0 : i32
    return %c0_i32, %c0_i32_0 : i32, i32
  }
  func.func @transform_2(%arg0: i32) -> (i32, i32) {
    %c0_i32 = arith.constant 0 : i32
    %c0_i32_0 = arith.constant 0 : i32
    return %arg0, %c0_i32 : i32, i32
  }
  func.func @transform_3(%arg0: i32) -> (i32, i32) {
    %c0_i32 = arith.constant 0 : i32
    %c0_i32_0 = arith.constant 0 : i32
    %c0_i32_1 = arith.constant 0 : i32
    return %c0_i32, %c0_i32_0 : i32, i32
  }
  func.func @transform_4(%arg0: i32) -> (i32, i32) {
    %c0_i32 = arith.constant 0 : i32
    %c0_i32_0 = arith.constant 0 : i32
    %c0_i32_1 = arith.constant 0 : i32
    return %c0_i32, %c0_i32_0 : i32, i32
  }
}

</mosaic_0001>

<llo_original>
// kernel: tpu_custom_call.1
$region0: #{tpu_custom_call.1}
  #allocation0 [shape = 'u32[]', space=smem, size = 0x4, offset = 0x4, fixed_abs, tag = 'smem constant byte address 0x4 - core index']
  #allocation1 [shape = 'u32[144,128]{1,0:T(1,128)}', space=vmem, size = 0x12000, scoped, tag = 'internal scratch']
  %s0 = inlined_call_operand.vmem [shape: bf16[128,36], index: 0, kind: input, shape index: {}]
  %s1 = inlined_call_operand.vmem [shape: bf16[36,128], index: 1, kind: input, shape index: {}]
  %s2 = inlined_call_operand.hbm [shape: f32[128,128], index: 2, kind: output, shape index: {0}]
  %s3 = inlined_call_operand.hbm [shape: f32[1,128], index: 3, kind: output, shape index: {1}]
  %s4 = inlined_call_operand.hbm [shape: f32[1,128], index: 4, kind: output, shape index: {2}]
  %5 = xla_tuple %s2, %s3, %s4
  %s6 = sld [smem:[#allocation0]]
  $region38: #{tpu_custom_call.1} parent=0
    _
  %s8 = ssub.s32 1, %s6
  %s9 = scalar_select 0, %s8, %s6
  $region1: #{tpu_custom_call.1} parent=0
    #allocation2 [shape = 'u8[65536]{0}', space=vmem, size = 0x10000, scoped, tag = 'output window, operand 0, single buffered']
    #allocation3 [shape = 's32[1]{0}', space=sflag, size = 0x4, scoped, tag = 'scoped memory for tpu_custom_call.1']
    #allocation4 [shape = 'u8[512]{0}', space=vmem, size = 0x400, scoped, tag = 'output window, operand 1, single buffered']
    #allocation5 [shape = 's32[1]{0}', space=sflag, size = 0x4, scoped, tag = 'scoped memory for tpu_custom_call.1']
    #allocation6 [shape = 'u8[512]{0}', space=vmem, size = 0x400, scoped, tag = 'output window, operand 2, single buffered']
    %10 = vsyncpa [#allocation3], 0
    %11 = vsyncpa [#allocation5], 0
    // Predicated region
    $region2: #{tpu_custom_call.1} parent=1 // pred_check
      _
    $region3: #{tpu_custom_call.1} parent=1 // pred_check_branch
      %13 = sbr.rel (0) target = $region5
    $region4: #{tpu_custom_call.1} parent=1 // pred_region
      _
    $region5: #{tpu_custom_call.1} parent=1 // pred_fallthru
      _
    // Predicated region
    $region6: #{tpu_custom_call.1} parent=1 // pred_check
      _
    $region7: #{tpu_custom_call.1} parent=1 // pred_check_branch
      %15 = sbr.rel (0) target = $region9
    $region8: #{tpu_custom_call.1} parent=1 // pred_region
      _
    $region9: #{tpu_custom_call.1} parent=1 // pred_fallthru
      _
    %v17 = vld [vmem:[%s0] sm:$0xf]
    %v18 = vld [vmem:[%s0 + $0x4] sm:$0xf]
    %v19 = vld [vmem:[%s0 + $0x8] sm:$0xf]
    %v20 = vld [vmem:[%s0 + $0xc] sm:$0xf]
    %v21 = vld [vmem:[%s0 + $0x10] sm:$0xf]
    %v22 = vld [vmem:[%s0 + $0x14] sm:$0xf]
    %v23 = vld [vmem:[%s0 + $0x18] sm:$0xf]
    %v24 = vld [vmem:[%s0 + $0x1c] sm:$0xf]
    %v25 = vld [vmem:[%s0 + $0x20] sm:$0xf]
    %v26 = vld [vmem:[%s0 + $0x24] sm:$0xf]
    %v27 = vld [vmem:[%s0 + $0x28] sm:$0xf]
    %v28 = vld [vmem:[%s0 + $0x2c] sm:$0xf]
    %v29 = vld [vmem:[%s0 + $0x30] sm:$0xf]
    %v30 = vld [vmem:[%s0 + $0x34] sm:$0xf]
    %v31 = vld [vmem:[%s0 + $0x38] sm:$0xf]
    %v32 = vld [vmem:[%s0 + $0x3c] sm:$0xf]
    %v33 = vld [vmem:[%s1] sm:$0xf]
    %v34 = vld [vmem:[%s1 + $0x4] sm:$0xf]
    %v35 = vld [vmem:[%s1 + $0x8] sm:$0xf]
    %v36 = vld [vmem:[%s1 + $0xc] sm:$0xf]
    %v37 = vld [vmem:[%s1 + $0x10] sm:$0x3]
    %v54 = vunpack.c.l.b16 %v17
    %v55 = vunpack.c.l.b16 %v18
    %v56 = vunpack.c.l.b16 %v19
    %v57 = vunpack.c.l.b16 %v20
    %v58 = vunpack.c.l.b16 %v21
    %v59 = vunpack.c.l.b16 %v22
    %v60 = vunpack.c.l.b16 %v23
    %v61 = vunpack.c.l.b16 %v24
    %v62 = vunpack.c.l.b16 %v25
    %v63 = vunpack.c.l.b16 %v26
    %v64 = vunpack.c.l.b16 %v27
    %v65 = vunpack.c.l.b16 %v28
    %v66 = vunpack.c.l.b16 %v29
    %v67 = vunpack.c.l.b16 %v30
    %v68 = vunpack.c.l.b16 %v31
    %v69 = vunpack.c.l.b16 %v32
    %v70 = vpack.c.b16 %v55, %v54
    %v71 = vpack.c.b16 %v57, %v56
    %v72 = vpack.c.b16 %v59, %v58
    %v73 = vpack.c.b16 %v61, %v60
    %v74 = vpack.c.b16 %v63, %v62
    %v75 = vpack.c.b16 %v65, %v64
    %v76 = vpack.c.b16 %v67, %v66
    %v77 = vpack.c.b16 %v69, %v68
    %v83 = vunpack.c.l.b16 %v33
    %v84 = vunpack.c.l.b16 %v34
    %v85 = vunpack.c.l.b16 %v35
    %v86 = vunpack.c.l.b16 %v36
    %v87 = vunpack.c.l.b16 %v37
    %v88 = vpack.c.b16 %v84, %v83
    %v89 = vpack.c.b16 %v86, %v85
    %v90 = vpack.c.b16 %v87, %v87
    %vm93 = vcmask 293888
    %v95 = vsel %vm93, %v70, 0
    %v98 = vsel %vm93, %v71, 0
    %v101 = vsel %vm93, %v72, 0
    %v104 = vsel %vm93, %v73, 0
    %v107 = vsel %vm93, %v74, 0
    %v110 = vsel %vm93, %v75, 0
    %v113 = vsel %vm93, %v76, 0
    %v116 = vsel %vm93, %v77, 0
    %vm118 = vcmask 1041408
    %v120 = vsel %vm118, %v90, 0
    %122 = vmatprep.subr.bf16.mxu0 0
    %123 = vmatpush1.bf16.msra.mxu0 %v88
    %124 = vmatprep.subr.bf16.mxu0 0
    %125 = vmatpush1.bf16.msra.mxu0 %v89
    %126 = vmatprep.subr.bf16.mxu0 0
    %127 = vmatpush1.bf16.msra.mxu0 %v120
    %128 = vmatprep.subr.bf16.mxu0 0
    %129 = vmatpush1.bf16.msra.mxu0 0
    %130 = vmatprep.subr.bf16.mxu0 0
    %131 = vmatpush1.bf16.msra.mxu0 0
    %132 = vmatprep.subr.bf16.mxu0 0
    %133 = vmatpush1.bf16.msra.mxu0 0
    %134 = vmatprep.subr.bf16.mxu0 0
    %135 = vmatpush1.bf16.msra.mxu0 0
    %136 = vmatprep.subr.bf16.mxu0 0
    %137 = vmatpush1.bf16.msra.mxu0 0
    %138 = vmatprep.subr.bf16.mxu0 0
    %139 = vmatpush1.bf16.msra.mxu0 0
    %140 = vmatprep.subr.bf16.mxu0 0
    %141 = vmatpush1.bf16.msra.mxu0 0
    %142 = vmatprep.subr.bf16.mxu0 0
    %143 = vmatpush1.bf16.msra.mxu0 0
    %144 = vmatprep.subr.bf16.mxu0 0
    %145 = vmatpush1.bf16.msra.mxu0 0
    %146 = vmatprep.subr.bf16.mxu0 0
    %147 = vmatpush1.bf16.msra.mxu0 0
    %148 = vmatprep.subr.bf16.mxu0 0
    %149 = vmatpush1.bf16.msra.mxu0 0
    %150 = vmatprep.subr.bf16.mxu0 0
    %151 = vmatpush1.bf16.msra.mxu0 0
    %152 = vmatprep.subr.bf16.mxu0 0
    %153 = vmatpush1.bf16.msra.mxu0 0
    %154 = vmatprep.mubr.bf16.mxu0 0
    %155 = vmatmul.mubr.bf16.gmra.mrb[0].mxu0 %v95
    %v156 = vpop.f32.mrb[0].mxu0
    %v157 = vadd.f32 0.0, %v156
    %v158 = vpop.f32.mrb[0].mxu0
    %v159 = vpop.f32.mrb[0].mxu0
    %v160 = vadd.f32 0.0, %v159
    %v161 = vpop.f32.mrb[0].mxu0
    %162 = vmatprep.mubr.bf16.mxu0 0
    %163 = vmatmul.mubr.bf16.gmra.mrb[0].mxu0 %v98
    %v164 = vpop.f32.mrb[0].mxu0
    %v165 = vadd.f32 0.0, %v164
    %v166 = vpop.f32.mrb[0].mxu0
    %v167 = vpop.f32.mrb[0].mxu0
    %v168 = vadd.f32 0.0, %v167
    %v169 = vpop.f32.mrb[0].mxu0
    %170 = vmatprep.mubr.bf16.mxu0 0
    %171 = vmatmul.mubr.bf16.gmra.mrb[0].mxu0 %v101
    %v172 = vpop.f32.mrb[0].mxu0
    %v173 = vadd.f32 0.0, %v172
    %v174 = vpop.f32.mrb[0].mxu0
    %v175 = vpop.f32.mrb[0].mxu0
    %v176 = vadd.f32 0.0, %v175
    %v177 = vpop.f32.mrb[0].mxu0
    %178 = vmatprep.mubr.bf16.mxu0 0
    %179 = vmatmul.mubr.bf16.gmra.mrb[0].mxu0 %v104
    %v180 = vpop.f32.mrb[0].mxu0
    %v181 = vadd.f32 0.0, %v180
    %v182 = vpop.f32.mrb[0].mxu0
    %v183 = vpop.f32.mrb[0].mxu0
    %v184 = vadd.f32 0.0, %v183
    %v185 = vpop.f32.mrb[0].mxu0
    %186 = vmatprep.mubr.bf16.mxu0 0
    %187 = vmatmul.mubr.bf16.gmra.mrb[0].mxu0 %v107
    %v188 = vpop.f32.mrb[0].mxu0
    %v189 = vadd.f32 0.0, %v188
    %v190 = vpop.f32.mrb[0].mxu0
    %v191 = vpop.f32.mrb[0].mxu0
    %v192 = vadd.f32 0.0, %v191
    %v193 = vpop.f32.mrb[0].mxu0
    %194 = vmatprep.mubr.bf16.mxu0 0
    %195 = vmatmul.mubr.bf16.gmra.mrb[0].mxu0 %v110
    %v196 = vpop.f32.mrb[0].mxu0
    %v197 = vadd.f32 0.0, %v196
    %v198 = vpop.f32.mrb[0].mxu0
    %v199 = vpop.f32.mrb[0].mxu0
    %v200 = vadd.f32 0.0, %v199
    %v201 = vpop.f32.mrb[0].mxu0
    %202 = vmatprep.mubr.bf16.mxu0 0
    %203 = vmatmul.mubr.bf16.gmra.mrb[0].mxu0 %v113
    %v204 = vpop.f32.mrb[0].mxu0
    %v205 = vadd.f32 0.0, %v204
    %v206 = vpop.f32.mrb[0].mxu0
    %v207 = vpop.f32.mrb[0].mxu0
    %v208 = vadd.f32 0.0, %v207
    %v209 = vpop.f32.mrb[0].mxu0
    %210 = vmatprep.mubr.bf16.mxu0 0
    %211 = vmatmul.mubr.bf16.gmra.mrb[0].mxu0 %v116
    %v212 = vpop.f32.mrb[0].mxu0
    %v213 = vadd.f32 0.0, %v212
    %v214 = vpop.f32.mrb[0].mxu0
    %v215 = vpop.f32.mrb[0].mxu0
    %v216 = vadd.f32 0.0, %v215
    %v217 = vpop.f32.mrb[0].mxu0
    %218 = vdwg.mxu0
    %219 = vst [vmem:[#allocation2] sm:$0xff] %v157
    %220 = vst [vmem:[#allocation2 + $0x8] sm:$0xff] %v160
    %221 = vst [vmem:[#allocation2 + $0x10] sm:$0xff] %v165
    %222 = vst [vmem:[#allocation2 + $0x18] sm:$0xff] %v168
    %223 = vst [vmem:[#allocation2 + $0x20] sm:$0xff] %v173
    %224 = vst [vmem:[#allocation2 + $0x28] sm:$0xff] %v176
    %225 = vst [vmem:[#allocation2 + $0x30] sm:$0xff] %v181
    %226 = vst [vmem:[#allocation2 + $0x38] sm:$0xff] %v184
    %227 = vst [vmem:[#allocation2 + $0x40] sm:$0xff] %v189
    %228 = vst [vmem:[#allocation2 + $0x48] sm:$0xff] %v192
    %229 = vst [vmem:[#allocation2 + $0x50] sm:$0xff] %v197
    %230 = vst [vmem:[#allocation2 + $0x58] sm:$0xff] %v200
    %231 = vst [vmem:[#allocation2 + $0x60] sm:$0xff] %v205
    %232 = vst [vmem:[#allocation2 + $0x68] sm:$0xff] %v208
    %233 = vst [vmem:[#allocation2 + $0x70] sm:$0xff] %v213
    %234 = vst [vmem:[#allocation2 + $0x78] sm:$0xff] %v216
    %p235 = scmp.eq.s32.totalorder 0, 0
    // Predicated region
    $region10: #{tpu_custom_call.1} parent=1 // pred_check
      %p236 = pneg %p235
    $region11: #{tpu_custom_call.1} parent=1 // pred_check_branch
      %238 = sbr.rel (%p236) target = $region13
    $region12: #{tpu_custom_call.1} parent=1 // pred_region
      %239 = vst [vmem:[#allocation4] sm:$0x1] 0.0
      %240 = vst [vmem:[#allocation6] sm:$0x1] 0.0
    $region13: #{tpu_custom_call.1} parent=1 // pred_fallthru
      _
    %v241 = vld [vmem:[#allocation4] sm:$0x1]
    %v242 = vadd.f32 %v157, %v160
    %v243 = vadd.f32 %v242, %v165
    %v244 = vadd.f32 %v243, %v168
    %v245 = vadd.f32 %v244, %v173
    %v246 = vadd.f32 %v245, %v176
    %v247 = vadd.f32 %v246, %v181
    %v248 = vadd.f32 %v247, %v184
    %v249 = vadd.f32 %v248, %v189
    %v250 = vadd.f32 %v249, %v192
    %v251 = vadd.f32 %v250, %v197
    %v252 = vadd.f32 %v251, %v200
    %v253 = vadd.f32 %v252, %v205
    %v254 = vadd.f32 %v253, %v208
    %v255 = vadd.f32 %v254, %v213
    %v256 = vadd.f32 %v255, %v216
    %v257 = vrot.slane %v256, 4
    %v258 = vadd.f32 %v256, %v257
    %v259 = vrot.slane %v258, 2
    %v260 = vadd.f32 %v258, %v259
    %v261 = vrot.slane %v260, 1
    %v262 = vadd.f32 %v260, %v261
    %v263 = vadd.f32 %v241, %v262
    %264 = vst [vmem:[#allocation4] sm:$0x1] %v263
    %v265 = vld [vmem:[#allocation6] sm:$0x1]
    %v266 = vmul.f32 %v157, %v157
    %v267 = vmul.f32 %v160, %v160
    %v268 = vmul.f32 %v165, %v165
    %v269 = vmul.f32 %v168, %v168
    %v270 = vmul.f32 %v173, %v173
    %v271 = vmul.f32 %v176, %v176
    %v272 = vmul.f32 %v181, %v181
    %v273 = vmul.f32 %v184, %v184
    %v274 = vmul.f32 %v189, %v189
    %v275 = vmul.f32 %v192, %v192
    %v276 = vmul.f32 %v197, %v197
    %v277 = vmul.f32 %v200, %v200
    %v278 = vmul.f32 %v205, %v205
    %v279 = vmul.f32 %v208, %v208
    %v280 = vmul.f32 %v213, %v213
    %v281 = vmul.f32 %v216, %v216
    %v282 = vadd.f32 %v266, %v267
    %v283 = vadd.f32 %v282, %v268
    %v284 = vadd.f32 %v283, %v269
    %v285 = vadd.f32 %v284, %v270
    %v286 = vadd.f32 %v285, %v271
    %v287 = vadd.f32 %v286, %v272
    %v288 = vadd.f32 %v287, %v273
    %v289 = vadd.f32 %v288, %v274
    %v290 = vadd.f32 %v289, %v275
    %v291 = vadd.f32 %v290, %v276
    %v292 = vadd.f32 %v291, %v277
    %v293 = vadd.f32 %v292, %v278
    %v294 = vadd.f32 %v293, %v279
    %v295 = vadd.f32 %v294, %v280
    %v296 = vadd.f32 %v295, %v281
    %v297 = vrot.slane %v296, 4
    %v298 = vadd.f32 %v296, %v297
    %v299 = vrot.slane %v298, 2
    %v300 = vadd.f32 %v298, %v299
    %v301 = vrot.slane %v300, 1
    %v302 = vadd.f32 %v300, %v301
    %v303 = vadd.f32 %v265, %v302
    %304 = vst [vmem:[#allocation6] sm:$0x1] %v303
    // Predicated region
    $region14: #{tpu_custom_call.1} parent=1 // pred_check
      _
    $region15: #{tpu_custom_call.1} parent=1 // pred_check_branch
      %306 = sbr.rel (0) target = $region17
    $region16: #{tpu_custom_call.1} parent=1 // pred_region
      %s308 = ssub.s32 2048, 2048
      %309 = vsyncadd [#allocation3], %s308
      %s310 = sshll.u32 [#allocation2], 4
      %s311 = int_to_ptr.vmem [resolvable:$true] %s310
      %316 = dma.vmem_to_hbm [thread:$0]  %s311, 2048, %s2, [#allocation3], 128, 128, 8
    $region17: #{tpu_custom_call.1} parent=1 // pred_fallthru
      _
    // Predicated region
    $region18: #{tpu_custom_call.1} parent=1 // pred_check
      _
    $region19: #{tpu_custom_call.1} parent=1 // pred_check_branch
      %318 = sbr.rel (0) target = $region21
    $region20: #{tpu_custom_call.1} parent=1 // pred_region
      %s320 = ssub.s32 16, 16
      %321 = vsyncadd [#allocation5], %s320
      %s323 = sshll.u32 [#allocation4], 4
      %s324 = int_to_ptr.vmem [resolvable:$true] %s323
      %326 = dma.vmem_to_hbm [thread:$0]  %s324, 16, %s3, [#allocation5]
    $region21: #{tpu_custom_call.1} parent=1 // pred_fallthru
      _
    // Predicated region
    $region22: #{tpu_custom_call.1} parent=1 // pred_check
      _
    $region23: #{tpu_custom_call.1} parent=1 // pred_check_branch
      %328 = sbr.rel (0) target = $region25
    $region24: #{tpu_custom_call.1} parent=1 // pred_region
      %s330 = ssub.s32 16, 16
      %331 = vsyncadd [#allocation5], %s330
      %s333 = sshll.u32 [#allocation6], 4
      %s334 = int_to_ptr.vmem [resolvable:$true] %s333
      %336 = dma.vmem_to_hbm [thread:$0]  %s334, 16, %s4, [#allocation5]
    $region25: #{tpu_custom_call.1} parent=1 // pred_fallthru
      _
    // Predicated region
    $region26: #{tpu_custom_call.1} parent=1 // pred_check
      _
    $region27: #{tpu_custom_call.1} parent=1 // pred_check_branch
      %338 = sbr.rel (0) target = $region29
    $region28: #{tpu_custom_call.1} parent=1 // pred_region
      %339 = dma.done [#allocation3], 2048
    $region29: #{tpu_custom_call.1} parent=1 // pred_fallthru
      _
    // Predicated region
    $region30: #{tpu_custom_call.1} parent=1 // pred_check
      _
    $region31: #{tpu_custom_call.1} parent=1 // pred_check_branch
      %341 = sbr.rel (0) target = $region33
    $region32: #{tpu_custom_call.1} parent=1 // pred_region
      %342 = dma.done [#allocation5], 16
    $region33: #{tpu_custom_call.1} parent=1 // pred_fallthru
      _
    // Predicated region
    $region34: #{tpu_custom_call.1} parent=1 // pred_check
      _
    $region35: #{tpu_custom_call.1} parent=1 // pred_check_branch
      %344 = sbr.rel (0) target = $region37
    $region36: #{tpu_custom_call.1} parent=1 // pred_region
      %345 = dma.done [#allocation5], 16
    $region37: #{tpu_custom_call.1} parent=1 // pred_fallthru
      _
    %346 = vsyncpa [#allocation3], 1
    %347 = vsyncpa [#allocation5], 1

</llo_original>
